<compile_context>
chip_gen: v7x
topology: tpu7x:2x2x1
jax: 0.10.0
libtpu: 0.0.40
codegen_flags: <defaults>
</compile_context>

<pallas_src>
import numpy as np
import jax
import jax.numpy as jnp
from jax.experimental import pallas as pl
from jax.experimental.pallas import tpu as pltpu


LANE = 128
DEFAULT_TILE_M = 256  # rows per tile (multiple of 8); safe for v7x 64 MiB VMEM


def _round_up(x, m):
    return ((x + m - 1) // m) * m


# ---------------------------------------------------------------------------
# Fused kernel: both heads (pi with masked softmax, v) on one row tile.
# ---------------------------------------------------------------------------
def _make_fused_kernel(action_size, a_pad):
    def kernel(x_ref,
               pw1, pb1, pw2, pb2, pw3, pb3,
               vw1, vb1, vw2, vb2, vw3, vb3,
               pi_ref, v_ref):
        x = x_ref[...]  # (tile_m, obs_dim) bf16

        def mlp3(w1, b1, w2, b2, w3, b3):
            # bf16 operands on the MXU, f32 accumulate; elementwise math in f32.
            h1 = jnp.tanh(
                jnp.dot(x, w1[...], preferred_element_type=jnp.float32) + b1[...])
            h2 = jnp.tanh(
                jnp.dot(h1.astype(jnp.bfloat16), w2[...],
                        preferred_element_type=jnp.float32) + b2[...])
            return (jnp.dot(h2.astype(jnp.bfloat16), w3[...],
                            preferred_element_type=jnp.float32) + b3[...])

        # --- policy head: logits -> masked softmax over the real action cols.
        logits = mlp3(pw1, pb1, pw2, pb2, pw3, pb3)          # (tile_m, a_pad) f32
        if action_size < a_pad:
            col = jax.lax.broadcasted_iota(jnp.int32, logits.shape, 1)
            logits = jnp.where(col < action_size, logits,
                               jnp.full_like(logits, -1e30))
        m = jnp.max(logits, axis=-1, keepdims=True)
        e = jnp.exp(logits - m)
        denom = jnp.sum(e, axis=-1, keepdims=True)
        pi_ref[...] = e * pl.reciprocal(denom, approx=True)

        # --- value head (real value lives in column 0 of the padded slab).
        v_ref[...] = mlp3(vw1, vb1, vw2, vb2, vw3, vb3)       # (tile_m, 128) f32

    return kernel


# ---------------------------------------------------------------------------
# Parameter construction (PyTorch nn.Linear-style uniform init) + lane padding.
# ---------------------------------------------------------------------------
def _init_mlp_params(key, sizes):
    """sizes = [in, h1, h2, out]; weights stored as (fan_in, fan_out), f32."""
    params = []
    for i in range(len(sizes) - 1):
        fan_in, fan_out = sizes[i], sizes[i + 1]
        key, kw, kb = jax.random.split(key, 3)
        bound = 1.0 / np.sqrt(fan_in)
        w = jax.random.uniform(kw, (fan_in, fan_out), jnp.float32, -bound, bound)
        b = jax.random.uniform(kb, (1, fan_out), jnp.float32, -bound, bound)
        params += [w, b]
    return tuple(params)


def _pad_params(params, in_size, hidden_sizes, out_size):
    """Zero-pad hidden/output dims to multiples of 128; weights -> bf16, biases f32."""
    sizes = [in_size] + list(hidden_sizes) + [out_size]
    padded = [in_size] + [_round_up(h, LANE) for h in hidden_sizes] \
                       + [_round_up(out_size, LANE)]
    out = []
    for i in range(len(sizes) - 1):
        w, b = params[2 * i], params[2 * i + 1]
        fi, fo = sizes[i], sizes[i + 1]
        fip, fop = padded[i], padded[i + 1]
        wp = jnp.zeros((fip, fop), jnp.float32).at[:fi, :fo].set(w)
        bp = jnp.zeros((1, fop), jnp.float32).at[:, :fo].set(b)
        out += [wp.astype(jnp.bfloat16), bp]
    return tuple(out)


# ---------------------------------------------------------------------------
# Model wrapper
# ---------------------------------------------------------------------------
class ModelPgNNDiscretePallas:
    def __init__(self, observation_shape, action_size,
                 policy_hidden_sizes=None, value_hidden_sizes=None,
                 key=jax.random.PRNGKey(0), tile_m=DEFAULT_TILE_M):
        self._obs_ndim = len(observation_shape)
        self._action_size = int(action_size)
        self._input_size = int(np.prod(observation_shape))
        self._tile_m = int(tile_m)
        self._a_pad = _round_up(self._action_size, LANE)
        self._v_pad = LANE

        policy_hidden_sizes = [400, 300] if policy_hidden_sizes is None else list(policy_hidden_sizes)
        value_hidden_sizes = [400, 300] if value_hidden_sizes is None else list(value_hidden_sizes)

        kpi, kv = jax.random.split(key)
        # Unpadded f32 parameters (ground truth, used by the pure-JAX reference).
        self.pi_params_f32 = _init_mlp_params(
            kpi, [self._input_size] + policy_hidden_sizes + [self._action_size])
        self.v_params_f32 = _init_mlp_params(
            kv, [self._input_size] + value_hidden_sizes + [1])
        # Lane-aligned bf16 weights / f32 biases fed to the kernel.
        self.pi_params = _pad_params(self.pi_params_f32, self._input_size,
                                     policy_hidden_sizes, self._action_size)
        self.v_params = _pad_params(self.v_params_f32, self._input_size,
                                    value_hidden_sizes, 1)

        self._kernel = _make_fused_kernel(self._action_size, self._a_pad)

    def __call__(self, observation, prev_action, prev_reward):
        # infer_leading_dims(observation, obs_ndim)
        lead_shape = observation.shape[:observation.ndim - self._obs_ndim]
        lead_dim = len(lead_shape)
        if lead_dim == 2:
            T, B = lead_shape
        elif lead_dim == 1:
            T, B = 1, lead_shape[0]
        else:
            T, B = 1, 1
        n = T * B
        obs_dim = self._input_size

        x = observation.reshape(n, obs_dim).astype(jnp.bfloat16)

        # Row tiling: tile_m multiple of 8, padded row count a multiple of tile_m.
        tile_m = min(self._tile_m, _round_up(max(n, 1), 8))
        n_pad = _round_up(n, tile_m)
        if n_pad != n:
            x = jnp.pad(x, ((0, n_pad - n), (0, 0)))
        grid = (n_pad // tile_m,)

        def row_spec(cols):
            return pl.BlockSpec((tile_m, cols), lambda i: (i, 0))

        def resident_spec(shape):
            # Whole-array block, same index every grid step -> stays in VMEM.
            return pl.BlockSpec(shape, lambda i: (0, 0))

        weights = self.pi_params + self.v_params
        in_specs = [row_spec(obs_dim)] + [resident_spec(a.shape) for a in weights]

        pi_pad, v_pad = pl.pallas_call(
            self._kernel,
            out_shape=(
                jax.ShapeDtypeStruct((n_pad, self._a_pad), jnp.float32),
                jax.ShapeDtypeStruct((n_pad, self._v_pad), jnp.float32),
            ),
            grid_spec=pltpu.PrefetchScalarGridSpec(
                num_scalar_prefetch=0,
                grid=grid,
                in_specs=in_specs,
                out_specs=[row_spec(self._a_pad), row_spec(self._v_pad)],
            ),
            compiler_params=pltpu.CompilerParams(
                dimension_semantics=("parallel",)),
        )(x, *weights)

        pi = pi_pad[:n, :self._action_size]
        v = v_pad[:n, 0]

        # restore_leading_dims
        if lead_dim == 2:
            pi = pi.reshape(T, B, self._action_size)
            v = v.reshape(T, B)
        elif lead_dim == 1:
            pi = pi.reshape(B, self._action_size)
            v = v.reshape(B)
        else:
            pi = pi.reshape(self._action_size)
            v = v.reshape(())
        return pi, v


# ---------------------------------------------------------------------------
# Pure-JAX f32 reference (for a correctness sanity check)
# ---------------------------------------------------------------------------
def _ref_forward(model, observation):
    T, B = observation.shape[:2]
    x = observation.reshape(T * B, -1).astype(jnp.float32)

    def mlp(x, p):
        w1, b1, w2, b2, w3, b3 = p
        h1 = jnp.tanh(x @ w1 + b1)
        h2 = jnp.tanh(h1 @ w2 + b2)
        return h2 @ w3 + b3

    pi = jax.nn.softmax(mlp(x, model.pi_params_f32), axis=-1).reshape(T, B, -1)
    v = mlp(x, model.v_params_f32)[:, 0].reshape(T, B)
    return pi, v


if __name__ == "__main__":
    # Small shapes consistent with the module: flat vector observation.
    T, B = 3, 4
    obs_dim = 16
    action_size = 8
    hidden = [32, 32]

    key = jax.random.PRNGKey(0)
    k_obs, k_act, k_rew, k_model = jax.random.split(key, 4)
    observation = jax.random.normal(k_obs, (T, B, obs_dim), jnp.float32)
    prev_action = jax.random.randint(k_act, (T, B), 0, action_size)   # unused in forward
    prev_reward = jax.random.normal(k_rew, (T, B), jnp.float32)       # unused in forward

    model = ModelPgNNDiscretePallas(
        observation_shape=(obs_dim,),
        action_size=action_size,
        policy_hidden_sizes=hidden,
        value_hidden_sizes=hidden,
        key=k_model,
    )

    pi, v = model(observation, prev_action, prev_reward)
    pi, v = jax.block_until_ready((pi, v))

    assert pi.shape == (T, B, action_size), pi.shape
    assert v.shape == (T, B), v.shape

    # bf16-matmul kernel vs f32 reference: loose tolerance.
    pi_ref, v_ref = _ref_forward(model, observation)
    np.testing.assert_allclose(np.asarray(pi), np.asarray(pi_ref), rtol=5e-2, atol=5e-2)
    np.testing.assert_allclose(np.asarray(v), np.asarray(v_ref), rtol=5e-2, atol=5e-2)
    np.testing.assert_allclose(np.asarray(pi).sum(-1), 1.0, atol=1e-2)

    print("KERNEL_OK")
</pallas_src>

<mosaic_0001>
module attributes {stable_mosaic.version = 11 : i64} {
  func.func @kernel(%arg0: i32, %arg1: memref<16x16xbf16, #tpu.memory_space<vmem>>, %arg2: memref<16x128xbf16, #tpu.memory_space<vmem>>, %arg3: memref<1x128xf32, #tpu.memory_space<vmem>>, %arg4: memref<128x128xbf16, #tpu.memory_space<vmem>>, %arg5: memref<1x128xf32, #tpu.memory_space<vmem>>, %arg6: memref<128x128xbf16, #tpu.memory_space<vmem>>, %arg7: memref<1x128xf32, #tpu.memory_space<vmem>>, %arg8: memref<16x128xbf16, #tpu.memory_space<vmem>>, %arg9: memref<1x128xf32, #tpu.memory_space<vmem>>, %arg10: memref<128x128xbf16, #tpu.memory_space<vmem>>, %arg11: memref<1x128xf32, #tpu.memory_space<vmem>>, %arg12: memref<128x128xbf16, #tpu.memory_space<vmem>>, %arg13: memref<1x128xf32, #tpu.memory_space<vmem>>, %arg14: memref<16x128xf32, #tpu.memory_space<vmem>>, %arg15: memref<16x128xf32, #tpu.memory_space<vmem>>) attributes {dimension_semantics = [#tpu.dimension_semantics<parallel>], iteration_bounds = array<i64: 1>, scalar_prefetch = 0 : i64, scratch_operands = 0 : i64, tpu.core_type = #tpu.core_type<tc>, window_params = [{transform_indices = @transform_0, window_bounds = array<i64: 16, 16>}, {pipeline_mode = #tpu.pipeline_mode<synchronous>, transform_indices = @transform_1, window_bounds = array<i64: 16, 128>}, {pipeline_mode = #tpu.pipeline_mode<synchronous>, transform_indices = @transform_2, window_bounds = array<i64: 1, 128>}, {pipeline_mode = #tpu.pipeline_mode<synchronous>, transform_indices = @transform_3, window_bounds = array<i64: 128, 128>}, {pipeline_mode = #tpu.pipeline_mode<synchronous>, transform_indices = @transform_4, window_bounds = array<i64: 1, 128>}, {pipeline_mode = #tpu.pipeline_mode<synchronous>, transform_indices = @transform_5, window_bounds = array<i64: 128, 128>}, {pipeline_mode = #tpu.pipeline_mode<synchronous>, transform_indices = @transform_6, window_bounds = array<i64: 1, 128>}, {pipeline_mode = #tpu.pipeline_mode<synchronous>, transform_indices = @transform_7, window_bounds = array<i64: 16, 128>}, {pipeline_mode = #tpu.pipeline_mode<synchronous>, transform_indices = @transform_8, window_bounds = array<i64: 1, 128>}, {pipeline_mode = #tpu.pipeline_mode<synchronous>, transform_indices = @transform_9, window_bounds = array<i64: 128, 128>}, {pipeline_mode = #tpu.pipeline_mode<synchronous>, transform_indices = @transform_10, window_bounds = array<i64: 1, 128>}, {pipeline_mode = #tpu.pipeline_mode<synchronous>, transform_indices = @transform_11, window_bounds = array<i64: 128, 128>}, {pipeline_mode = #tpu.pipeline_mode<synchronous>, transform_indices = @transform_12, window_bounds = array<i64: 1, 128>}, {transform_indices = @transform_13, window_bounds = array<i64: 16, 128>}, {transform_indices = @transform_14, window_bounds = array<i64: 16, 128>}]} {
    %c0 = arith.constant 0 : index
    %c0_0 = arith.constant 0 : index
    %0 = vector.load %arg1[%c0, %c0_0] : memref<16x16xbf16, #tpu.memory_space<vmem>>, vector<16x16xbf16>
    %c0_1 = arith.constant 0 : index
    %c0_2 = arith.constant 0 : index
    %1 = vector.load %arg2[%c0_1, %c0_2] : memref<16x128xbf16, #tpu.memory_space<vmem>>, vector<16x128xbf16>
    %cst = arith.constant dense<0.000000e+00> : vector<16x128xf32>
    %2 = tpu.matmul %0, %1, %cst {dimension_numbers = #tpu.dot_dimension_numbers<[1], [0], [0], [1], [0, 0, 1, 1], [], []>} : vector<16x16xbf16>, vector<16x128xbf16>, vector<16x128xf32> -> vector<16x128xf32>
    %c0_3 = arith.constant 0 : index
    %c0_4 = arith.constant 0 : index
    %3 = vector.load %arg3[%c0_3, %c0_4] : memref<1x128xf32, #tpu.memory_space<vmem>>, vector<1x128xf32>
    %4 = vector.broadcast %3 : vector<1x128xf32> to vector<16x128xf32>
    %5 = arith.addf %2, %4 : vector<16x128xf32>
    %6 = math.tanh %5 : vector<16x128xf32>
    %7 = arith.truncf %6 : vector<16x128xf32> to vector<16x128xbf16>
    %c0_5 = arith.constant 0 : index
    %c0_6 = arith.constant 0 : index
    %8 = vector.load %arg4[%c0_5, %c0_6] : memref<128x128xbf16, #tpu.memory_space<vmem>>, vector<128x128xbf16>
    %cst_7 = arith.constant dense<0.000000e+00> : vector<16x128xf32>
    %9 = tpu.matmul %7, %8, %cst_7 {dimension_numbers = #tpu.dot_dimension_numbers<[1], [0], [0], [1], [0, 0, 1, 1], [], []>} : vector<16x128xbf16>, vector<128x128xbf16>, vector<16x128xf32> -> vector<16x128xf32>
    %c0_8 = arith.constant 0 : index
    %c0_9 = arith.constant 0 : index
    %10 = vector.load %arg5[%c0_8, %c0_9] : memref<1x128xf32, #tpu.memory_space<vmem>>, vector<1x128xf32>
    %11 = vector.broadcast %10 : vector<1x128xf32> to vector<16x128xf32>
    %12 = arith.addf %9, %11 : vector<16x128xf32>
    %13 = math.tanh %12 : vector<16x128xf32>
    %14 = arith.truncf %13 : vector<16x128xf32> to vector<16x128xbf16>
    %c0_10 = arith.constant 0 : index
    %c0_11 = arith.constant 0 : index
    %15 = vector.load %arg6[%c0_10, %c0_11] : memref<128x128xbf16, #tpu.memory_space<vmem>>, vector<128x128xbf16>
    %cst_12 = arith.constant dense<0.000000e+00> : vector<16x128xf32>
    %16 = tpu.matmul %14, %15, %cst_12 {dimension_numbers = #tpu.dot_dimension_numbers<[1], [0], [0], [1], [0, 0, 1, 1], [], []>} : vector<16x128xbf16>, vector<128x128xbf16>, vector<16x128xf32> -> vector<16x128xf32>
    %c0_13 = arith.constant 0 : index
    %c0_14 = arith.constant 0 : index
    %17 = vector.load %arg7[%c0_13, %c0_14] : memref<1x128xf32, #tpu.memory_space<vmem>>, vector<1x128xf32>
    %18 = vector.broadcast %17 : vector<1x128xf32> to vector<16x128xf32>
    %19 = arith.addf %16, %18 : vector<16x128xf32>
    %20 = tpu.iota {dimensions = array<i32: 1>} : vector<16x128xi32>
    %c8_i32 = arith.constant 8 : i32
    %21 = vector.broadcast %c8_i32 : i32 to vector<16x128xi32>
    %22 = arith.cmpi slt, %20, %21 : vector<16x128xi32>
    %cst_15 = arith.constant -1.000000e+30 : f32
    %23 = vector.broadcast %cst_15 : f32 to vector<16x128xf32>
    %24 = arith.select %22, %19, %23 : vector<16x128xi1>, vector<16x128xf32>
    %cst_16 = arith.constant dense<0xFF800000> : vector<16xf32>
    %25 = vector.multi_reduction <maximumf>, %24, %cst_16 [1] : vector<16x128xf32> to vector<16xf32>
    %26 = vector.shape_cast %25 : vector<16xf32> to vector<16x1xf32>
    %27 = vector.broadcast %26 : vector<16x1xf32> to vector<16x128xf32>
    %28 = arith.subf %24, %27 : vector<16x128xf32>
    %29 = math.exp %28 : vector<16x128xf32>
    %cst_17 = arith.constant dense<0.000000e+00> : vector<16xf32>
    %30 = vector.multi_reduction <add>, %29, %cst_17 [1] : vector<16x128xf32> to vector<16xf32>
    %31 = vector.shape_cast %30 : vector<16xf32> to vector<16x1xf32>
    %32 = tpu.reciprocal %31 {approx = true} : vector<16x1xf32> -> vector<16x1xf32>
    %33 = vector.broadcast %32 : vector<16x1xf32> to vector<16x128xf32>
    %34 = arith.mulf %29, %33 : vector<16x128xf32>
    %c0_18 = arith.constant 0 : index
    %c0_19 = arith.constant 0 : index
    %35 = vector.load %arg14[%c0_18, %c0_19] : memref<16x128xf32, #tpu.memory_space<vmem>>, vector<16x128xf32>
    tpu.vector_store %arg14[%c0_18, %c0_19], %34 {strides = array<i32>} : memref<16x128xf32, #tpu.memory_space<vmem>>, vector<16x128xf32>,
    %c0_20 = arith.constant 0 : index
    %c0_21 = arith.constant 0 : index
    %36 = vector.load %arg8[%c0_20, %c0_21] : memref<16x128xbf16, #tpu.memory_space<vmem>>, vector<16x128xbf16>
    %cst_22 = arith.constant dense<0.000000e+00> : vector<16x128xf32>
    %37 = tpu.matmul %0, %36, %cst_22 {dimension_numbers = #tpu.dot_dimension_numbers<[1], [0], [0], [1], [0, 0, 1, 1], [], []>} : vector<16x16xbf16>, vector<16x128xbf16>, vector<16x128xf32> -> vector<16x128xf32>
    %c0_23 = arith.constant 0 : index
    %c0_24 = arith.constant 0 : index
    %38 = vector.load %arg9[%c0_23, %c0_24] : memref<1x128xf32, #tpu.memory_space<vmem>>, vector<1x128xf32>
    %39 = vector.broadcast %38 : vector<1x128xf32> to vector<16x128xf32>
    %40 = arith.addf %37, %39 : vector<16x128xf32>
    %41 = math.tanh %40 : vector<16x128xf32>
    %42 = arith.truncf %41 : vector<16x128xf32> to vector<16x128xbf16>
    %c0_25 = arith.constant 0 : index
    %c0_26 = arith.constant 0 : index
    %43 = vector.load %arg10[%c0_25, %c0_26] : memref<128x128xbf16, #tpu.memory_space<vmem>>, vector<128x128xbf16>
    %cst_27 = arith.constant dense<0.000000e+00> : vector<16x128xf32>
    %44 = tpu.matmul %42, %43, %cst_27 {dimension_numbers = #tpu.dot_dimension_numbers<[1], [0], [0], [1], [0, 0, 1, 1], [], []>} : vector<16x128xbf16>, vector<128x128xbf16>, vector<16x128xf32> -> vector<16x128xf32>
    %c0_28 = arith.constant 0 : index
    %c0_29 = arith.constant 0 : index
    %45 = vector.load %arg11[%c0_28, %c0_29] : memref<1x128xf32, #tpu.memory_space<vmem>>, vector<1x128xf32>
    %46 = vector.broadcast %45 : vector<1x128xf32> to vector<16x128xf32>
    %47 = arith.addf %44, %46 : vector<16x128xf32>
    %48 = math.tanh %47 : vector<16x128xf32>
    %49 = arith.truncf %48 : vector<16x128xf32> to vector<16x128xbf16>
    %c0_30 = arith.constant 0 : index
    %c0_31 = arith.constant 0 : index
    %50 = vector.load %arg12[%c0_30, %c0_31] : memref<128x128xbf16, #tpu.memory_space<vmem>>, vector<128x128xbf16>
    %cst_32 = arith.constant dense<0.000000e+00> : vector<16x128xf32>
    %51 = tpu.matmul %49, %50, %cst_32 {dimension_numbers = #tpu.dot_dimension_numbers<[1], [0], [0], [1], [0, 0, 1, 1], [], []>} : vector<16x128xbf16>, vector<128x128xbf16>, vector<16x128xf32> -> vector<16x128xf32>
    %c0_33 = arith.constant 0 : index
    %c0_34 = arith.constant 0 : index
    %52 = vector.load %arg13[%c0_33, %c0_34] : memref<1x128xf32, #tpu.memory_space<vmem>>, vector<1x128xf32>
    %53 = vector.broadcast %52 : vector<1x128xf32> to vector<16x128xf32>
    %54 = arith.addf %51, %53 : vector<16x128xf32>
    %c0_35 = arith.constant 0 : index
    %c0_36 = arith.constant 0 : index
    %55 = vector.load %arg15[%c0_35, %c0_36] : memref<16x128xf32, #tpu.memory_space<vmem>>, vector<16x128xf32>
    tpu.vector_store %arg15[%c0_35, %c0_36], %54 {strides = array<i32>} : memref<16x128xf32, #tpu.memory_space<vmem>>, vector<16x128xf32>,
    return
  }
  func.func @transform_0(%arg0: i32) -> (i32, i32) {
    %c0_i32 = arith.constant 0 : i32
    %c0_i32_0 = arith.constant 0 : i32
    return %arg0, %c0_i32 : i32, i32
  }
  func.func @transform_1(%arg0: i32) -> (i32, i32) {
    %c0_i32 = arith.constant 0 : i32
    %c0_i32_0 = arith.constant 0 : i32
    %c0_i32_1 = arith.constant 0 : i32
    return %c0_i32, %c0_i32_0 : i32, i32
  }
  func.func @transform_2(%arg0: i32) -> (i32, i32) {
    %c0_i32 = arith.constant 0 : i32
    %c0_i32_0 = arith.constant 0 : i32
    %c0_i32_1 = arith.constant 0 : i32
    return %c0_i32, %c0_i32_0 : i32, i32
  }
  func.func @transform_3(%arg0: i32) -> (i32, i32) {
    %c0_i32 = arith.constant 0 : i32
    %c0_i32_0 = arith.constant 0 : i32
    %c0_i32_1 = arith.constant 0 : i32
    return %c0_i32, %c0_i32_0 : i32, i32
  }
  func.func @transform_4(%arg0: i32) -> (i32, i32) {
    %c0_i32 = arith.constant 0 : i32
    %c0_i32_0 = arith.constant 0 : i32
    %c0_i32_1 = arith.constant 0 : i32
    return %c0_i32, %c0_i32_0 : i32, i32
  }
  func.func @transform_5(%arg0: i32) -> (i32, i32) {
    %c0_i32 = arith.constant 0 : i32
    %c0_i32_0 = arith.constant 0 : i32
    %c0_i32_1 = arith.constant 0 : i32
    return %c0_i32, %c0_i32_0 : i32, i32
  }
  func.func @transform_6(%arg0: i32) -> (i32, i32) {
    %c0_i32 = arith.constant 0 : i32
    %c0_i32_0 = arith.constant 0 : i32
    %c0_i32_1 = arith.constant 0 : i32
    return %c0_i32, %c0_i32_0 : i32, i32
  }
  func.func @transform_7(%arg0: i32) -> (i32, i32) {
    %c0_i32 = arith.constant 0 : i32
    %c0_i32_0 = arith.constant 0 : i32
    %c0_i32_1 = arith.constant 0 : i32
    return %c0_i32, %c0_i32_0 : i32, i32
  }
  func.func @transform_8(%arg0: i32) -> (i32, i32) {
    %c0_i32 = arith.constant 0 : i32
    %c0_i32_0 = arith.constant 0 : i32
    %c0_i32_1 = arith.constant 0 : i32
    return %c0_i32, %c0_i32_0 : i32, i32
  }
  func.func @transform_9(%arg0: i32) -> (i32, i32) {
    %c0_i32 = arith.constant 0 : i32
    %c0_i32_0 = arith.constant 0 : i32
    %c0_i32_1 = arith.constant 0 : i32
    return %c0_i32, %c0_i32_0 : i32, i32
  }
  func.func @transform_10(%arg0: i32) -> (i32, i32) {
    %c0_i32 = arith.constant 0 : i32
    %c0_i32_0 = arith.constant 0 : i32
    %c0_i32_1 = arith.constant 0 : i32
    return %c0_i32, %c0_i32_0 : i32, i32
  }
  func.func @transform_11(%arg0: i32) -> (i32, i32) {
    %c0_i32 = arith.constant 0 : i32
    %c0_i32_0 = arith.constant 0 : i32
    %c0_i32_1 = arith.constant 0 : i32
    return %c0_i32, %c0_i32_0 : i32, i32
  }
  func.func @transform_12(%arg0: i32) -> (i32, i32) {
    %c0_i32 = arith.constant 0 : i32
    %c0_i32_0 = arith.constant 0 : i32
    %c0_i32_1 = arith.constant 0 : i32
    return %c0_i32, %c0_i32_0 : i32, i32
  }
  func.func @transform_13(%arg0: i32) -> (i32, i32) {
    %c0_i32 = arith.constant 0 : i32
    %c0_i32_0 = arith.constant 0 : i32
    return %arg0, %c0_i32 : i32, i32
  }
  func.func @transform_14(%arg0: i32) -> (i32, i32) {
    %c0_i32 = arith.constant 0 : i32
    %c0_i32_0 = arith.constant 0 : i32
    return %arg0, %c0_i32 : i32, i32
  }
}

</mosaic_0001>

<llo_original>
// kernel: tpu_custom_call.1
$region0: #{tpu_custom_call.1}
  #allocation0 [shape = 'u32[]', space=smem, size = 0x4, offset = 0x4, fixed_abs, tag = 'smem constant byte address 0x4 - core index']
  #allocation1 [shape = 'u32[144,128]{1,0:T(1,128)}', space=vmem, size = 0x12000, scoped, tag = 'internal scratch']
  %s0 = inlined_call_operand.hbm [shape: bf16[16,16], index: 0, kind: input, shape index: {}]
  %s1 = inlined_call_operand.hbm [shape: bf16[16,128], index: 1, kind: input, shape index: {}]
  %s2 = inlined_call_operand.vmem [shape: f32[1,128], index: 2, kind: input, shape index: {}]
  %s3 = inlined_call_operand.hbm [shape: bf16[128,128], index: 3, kind: input, shape index: {}]
  %s4 = inlined_call_operand.vmem [shape: f32[1,128], index: 4, kind: input, shape index: {}]
  %s5 = inlined_call_operand.hbm [shape: bf16[128,128], index: 5, kind: input, shape index: {}]
  %s6 = inlined_call_operand.vmem [shape: f32[1,128], index: 6, kind: input, shape index: {}]
  %s7 = inlined_call_operand.vmem [shape: bf16[16,128], index: 7, kind: input, shape index: {}]
  %s8 = inlined_call_operand.vmem [shape: f32[1,128], index: 8, kind: input, shape index: {}]
  %s9 = inlined_call_operand.hbm [shape: bf16[128,128], index: 9, kind: input, shape index: {}]
  %s10 = inlined_call_operand.vmem [shape: f32[1,128], index: 10, kind: input, shape index: {}]
  %s11 = inlined_call_operand.hbm [shape: bf16[128,128], index: 11, kind: input, shape index: {}]
  %s12 = inlined_call_operand.vmem [shape: f32[1,128], index: 12, kind: input, shape index: {}]
  %s13 = inlined_call_operand.hbm [shape: f32[16,128], index: 13, kind: output, shape index: {0}]
  %s14 = inlined_call_operand.hbm [shape: f32[16,128], index: 14, kind: output, shape index: {1}]
  %15 = xla_tuple %s13, %s14
  %s16 = sld [smem:[#allocation0]]
  $region94: #{tpu_custom_call.1} parent=0
    _
  %s18 = ssub.s32 1, %s16
  %s19 = scalar_select 0, %s18, %s16
  $region1: #{tpu_custom_call.1} parent=0
    #allocation2 [shape = 'u8[4096]{0}', space=vmem, size = 0x1000, scoped, tag = 'input window, operand 0, single buffered']
    #allocation3 [shape = 's32[1]{0}', space=sflag, size = 0x4, scoped, tag = 'scoped memory for tpu_custom_call.1']
    #allocation4 [shape = 's32[1]{0}', space=sflag, size = 0x4, scoped, tag = 'scoped memory for tpu_custom_call.1']
    #allocation5 [shape = 'u8[4096]{0}', space=vmem, size = 0x1000, scoped, tag = 'input window, operand 1, single buffered']
    #allocation6 [shape = 's32[1]{0}', space=sflag, size = 0x4, scoped, tag = 'scoped memory for tpu_custom_call.1']
    #allocation7 [shape = 'u8[32768]{0}', space=vmem, size = 0x8000, scoped, tag = 'input window, operand 3, single buffered']
    #allocation8 [shape = 'u8[32768]{0}', space=vmem, size = 0x8000, scoped, tag = 'input window, operand 5, single buffered']
    #allocation9 [shape = 's32[1]{0}', space=sflag, size = 0x4, scoped, tag = 'scoped memory for tpu_custom_call.1']
    #allocation10 [shape = 'u8[32768]{0}', space=vmem, size = 0x8000, scoped, tag = 'input window, operand 9, single buffered']
    #allocation11 [shape = 'u8[32768]{0}', space=vmem, size = 0x8000, scoped, tag = 'input window, operand 11, single buffered']
    #allocation12 [shape = 's32[1]{0}', space=sflag, size = 0x4, scoped, tag = 'scoped memory for tpu_custom_call.1']
    #allocation13 [shape = 'u8[8192]{0}', space=vmem, size = 0x2000, scoped, tag = 'output window, operand 0, single buffered']
    #allocation14 [shape = 'u8[8192]{0}', space=vmem, size = 0x2000, scoped, tag = 'output window, operand 1, single buffered']
    #allocation15 [shape = 's32[1]{0}', space=sflag, size = 0x4, scoped, tag = 'scoped memory for tpu_custom_call.1']
    %20 = vsyncpa [#allocation3], 0
    %21 = vsyncpa [#allocation6], 0
    %22 = vsyncpa [#allocation9], 0
    %23 = vsyncpa [#allocation12], 0
    %24 = vsyncpa [#allocation4], 0
    %25 = vsyncpa [#allocation15], 0
    // Predicated region
    $region2: #{tpu_custom_call.1} parent=1 // pred_check
      _
    $region3: #{tpu_custom_call.1} parent=1 // pred_check_branch
      %27 = sbr.rel (0) target = $region5
    $region4: #{tpu_custom_call.1} parent=1 // pred_region
      %s29 = ssub.s32 128, 128
      %30 = vsyncadd [#allocation3], %s29
      %s31 = sshll.u32 [#allocation2], 4
      %s32 = int_to_ptr.vmem [resolvable:$true] %s31
      %37 = dma.hbm_to_vmem [thread:$0]  %s0, 128, %s32, [#allocation3], 64, 64, 4
    $region5: #{tpu_custom_call.1} parent=1 // pred_fallthru
      _
    // Predicated region
    $region6: #{tpu_custom_call.1} parent=1 // pred_check
      _
    $region7: #{tpu_custom_call.1} parent=1 // pred_check_branch
      %39 = sbr.rel (0) target = $region9
    $region8: #{tpu_custom_call.1} parent=1 // pred_region
      %s41 = ssub.s32 128, 128
      %42 = vsyncadd [#allocation6], %s41
      %s43 = sshll.u32 [#allocation5], 4
      %s44 = int_to_ptr.vmem [resolvable:$true] %s43
      %49 = dma.hbm_to_vmem [thread:$0]  %s1, 128, %s44, [#allocation6], 64, 64, 4
    $region9: #{tpu_custom_call.1} parent=1 // pred_fallthru
      _
    // Predicated region
    $region10: #{tpu_custom_call.1} parent=1 // pred_check
      _
    $region11: #{tpu_custom_call.1} parent=1 // pred_check_branch
      %51 = sbr.rel (0) target = $region13
    $region12: #{tpu_custom_call.1} parent=1 // pred_region
      _
    $region13: #{tpu_custom_call.1} parent=1 // pred_fallthru
      _
    // Predicated region
    $region14: #{tpu_custom_call.1} parent=1 // pred_check
      _
    $region15: #{tpu_custom_call.1} parent=1 // pred_check_branch
      %53 = sbr.rel (0) target = $region17
    $region16: #{tpu_custom_call.1} parent=1 // pred_region
      %s55 = ssub.s32 1024, 1024
      %56 = vsyncadd [#allocation6], %s55
      %s57 = sshll.u32 [#allocation7], 4
      %s58 = int_to_ptr.vmem [resolvable:$true] %s57
      %63 = dma.hbm_to_vmem [thread:$0]  %s3, 1024, %s58, [#allocation6], 64, 64, 4
    $region17: #{tpu_custom_call.1} parent=1 // pred_fallthru
      _
    // Predicated region
    $region18: #{tpu_custom_call.1} parent=1 // pred_check
      _
    $region19: #{tpu_custom_call.1} parent=1 // pred_check_branch
      %65 = sbr.rel (0) target = $region21
    $region20: #{tpu_custom_call.1} parent=1 // pred_region
      _
    $region21: #{tpu_custom_call.1} parent=1 // pred_fallthru
      _
    // Predicated region
    $region22: #{tpu_custom_call.1} parent=1 // pred_check
      _
    $region23: #{tpu_custom_call.1} parent=1 // pred_check_branch
      %67 = sbr.rel (0) target = $region25
    $region24: #{tpu_custom_call.1} parent=1 // pred_region
      %s69 = ssub.s32 1024, 1024
      %70 = vsyncadd [#allocation9], %s69
      %s71 = sshll.u32 [#allocation8], 4
      %s72 = int_to_ptr.vmem [resolvable:$true] %s71
      %77 = dma.hbm_to_vmem [thread:$0]  %s5, 1024, %s72, [#allocation9], 64, 64, 4
    $region25: #{tpu_custom_call.1} parent=1 // pred_fallthru
      _
    // Predicated region
    $region26: #{tpu_custom_call.1} parent=1 // pred_check
      _
    $region27: #{tpu_custom_call.1} parent=1 // pred_check_branch
      %79 = sbr.rel (0) target = $region29
    $region28: #{tpu_custom_call.1} parent=1 // pred_region
      _
    $region29: #{tpu_custom_call.1} parent=1 // pred_fallthru
      _
    // Predicated region
    $region30: #{tpu_custom_call.1} parent=1 // pred_check
      _
    $region31: #{tpu_custom_call.1} parent=1 // pred_check_branch
      %81 = sbr.rel (0) target = $region33
    $region32: #{tpu_custom_call.1} parent=1 // pred_region
      _
    $region33: #{tpu_custom_call.1} parent=1 // pred_fallthru
      _
    // Predicated region
    $region34: #{tpu_custom_call.1} parent=1 // pred_check
      _
    $region35: #{tpu_custom_call.1} parent=1 // pred_check_branch
      %83 = sbr.rel (0) target = $region37
    $region36: #{tpu_custom_call.1} parent=1 // pred_region
      _
    $region37: #{tpu_custom_call.1} parent=1 // pred_fallthru
      _
    // Predicated region
    $region38: #{tpu_custom_call.1} parent=1 // pred_check
      _
    $region39: #{tpu_custom_call.1} parent=1 // pred_check_branch
      %85 = sbr.rel (0) target = $region41
    $region40: #{tpu_custom_call.1} parent=1 // pred_region
      %s87 = ssub.s32 1024, 1024
      %88 = vsyncadd [#allocation9], %s87
      %s89 = sshll.u32 [#allocation10], 4
      %s90 = int_to_ptr.vmem [resolvable:$true] %s89
      %95 = dma.hbm_to_vmem [thread:$0]  %s9, 1024, %s90, [#allocation9], 64, 64, 4
    $region41: #{tpu_custom_call.1} parent=1 // pred_fallthru
      _
    // Predicated region
    $region42: #{tpu_custom_call.1} parent=1 // pred_check
      _
    $region43: #{tpu_custom_call.1} parent=1 // pred_check_branch
      %97 = sbr.rel (0) target = $region45
    $region44: #{tpu_custom_call.1} parent=1 // pred_region
      _
    $region45: #{tpu_custom_call.1} parent=1 // pred_fallthru
      _
    // Predicated region
    $region46: #{tpu_custom_call.1} parent=1 // pred_check
      _
    $region47: #{tpu_custom_call.1} parent=1 // pred_check_branch
      %99 = sbr.rel (0) target = $region49
    $region48: #{tpu_custom_call.1} parent=1 // pred_region
      %s101 = ssub.s32 1024, 1024
      %102 = vsyncadd [#allocation12], %s101
      %s103 = sshll.u32 [#allocation11], 4
      %s104 = int_to_ptr.vmem [resolvable:$true] %s103
      %109 = dma.hbm_to_vmem [thread:$0]  %s11, 1024, %s104, [#allocation12], 64, 64, 4
    $region49: #{tpu_custom_call.1} parent=1 // pred_fallthru
      _
    // Predicated region
    $region50: #{tpu_custom_call.1} parent=1 // pred_check
      _
    $region51: #{tpu_custom_call.1} parent=1 // pred_check_branch
      %111 = sbr.rel (0) target = $region53
    $region52: #{tpu_custom_call.1} parent=1 // pred_region
      _
    $region53: #{tpu_custom_call.1} parent=1 // pred_fallthru
      _
    // Predicated region
    $region54: #{tpu_custom_call.1} parent=1 // pred_check
      _
    $region55: #{tpu_custom_call.1} parent=1 // pred_check_branch
      %113 = sbr.rel (0) target = $region57
    $region56: #{tpu_custom_call.1} parent=1 // pred_region
      %114 = dma.done [#allocation3], 128
    $region57: #{tpu_custom_call.1} parent=1 // pred_fallthru
      _
    // Predicated region
    $region58: #{tpu_custom_call.1} parent=1 // pred_check
      _
    $region59: #{tpu_custom_call.1} parent=1 // pred_check_branch
      %116 = sbr.rel (0) target = $region61
    $region60: #{tpu_custom_call.1} parent=1 // pred_region
      %117 = dma.done [#allocation6], 128
    $region61: #{tpu_custom_call.1} parent=1 // pred_fallthru
      _
    // Predicated region
    $region62: #{tpu_custom_call.1} parent=1 // pred_check
      _
    $region63: #{tpu_custom_call.1} parent=1 // pred_check_branch
      %119 = sbr.rel (0) target = $region65
    $region64: #{tpu_custom_call.1} parent=1 // pred_region
      %120 = dma.done [#allocation6], 1024
    $region65: #{tpu_custom_call.1} parent=1 // pred_fallthru
      _
    // Predicated region
    $region66: #{tpu_custom_call.1} parent=1 // pred_check
      _
    $region67: #{tpu_custom_call.1} parent=1 // pred_check_branch
      %122 = sbr.rel (0) target = $region69
    $region68: #{tpu_custom_call.1} parent=1 // pred_region
      %123 = dma.done [#allocation9], 1024
    $region69: #{tpu_custom_call.1} parent=1 // pred_fallthru
      _
    // Predicated region
    $region70: #{tpu_custom_call.1} parent=1 // pred_check
      _
    $region71: #{tpu_custom_call.1} parent=1 // pred_check_branch
      %125 = sbr.rel (0) target = $region73
    $region72: #{tpu_custom_call.1} parent=1 // pred_region
      %126 = dma.done [#allocation9], 1024
    $region73: #{tpu_custom_call.1} parent=1 // pred_fallthru
      _
    // Predicated region
    $region74: #{tpu_custom_call.1} parent=1 // pred_check
      _
    $region75: #{tpu_custom_call.1} parent=1 // pred_check_branch
      %128 = sbr.rel (0) target = $region77
    $region76: #{tpu_custom_call.1} parent=1 // pred_region
      %129 = dma.done [#allocation12], 1024
    $region77: #{tpu_custom_call.1} parent=1 // pred_fallthru
      _
    %v131 = vld [vmem:[#allocation2] sm:$0xf]
    %v132 = vld [vmem:[#allocation2 + $0x4] sm:$0xf]
    %v133 = vld [vmem:[#allocation5] sm:$0xf]
    %v134 = vld [vmem:[#allocation5 + $0x4] sm:$0xf]
    %v135 = vld [vmem:[%s2] sm:$0x1]
    %v137 = vlaneseq
    %v138 = vshrl.u32 %v137, 7
    %v139 = vsub.s32 0, %v138
    %v140 = vrot.slane %v135, %v139
    %v144 = vunpack.c.l.b16 %v131
    %v145 = vunpack.c.l.b16 %v132
    %v146 = vpack.c.b16 %v145, %v144
    %v149 = vunpack.c.l.b16 %v133
    %v150 = vunpack.c.l.b16 %v134
    %v151 = vpack.c.b16 %v150, %v149
    %vm153 = vcmask 130048
    %v155 = vsel %vm153, %v146, 0
    %157 = vmatprep.subr.bf16.mxu0 0
    %158 = vmatpush1.bf16.msra.mxu0 %v151
    %159 = vmatprep.subr.bf16.mxu0 0
    %160 = vmatpush1.bf16.msra.mxu0 0
    %161 = vmatprep.subr.bf16.mxu0 0
    %162 = vmatpush1.bf16.msra.mxu0 0
    %163 = vmatprep.subr.bf16.mxu0 0
    %164 = vmatpush1.bf16.msra.mxu0 0
    %165 = vmatprep.subr.bf16.mxu0 0
    %166 = vmatpush1.bf16.msra.mxu0 0
    %167 = vmatprep.subr.bf16.mxu0 0
    %168 = vmatpush1.bf16.msra.mxu0 0
    %169 = vmatprep.subr.bf16.mxu0 0
    %170 = vmatpush1.bf16.msra.mxu0 0
    %171 = vmatprep.subr.bf16.mxu0 0
    %172 = vmatpush1.bf16.msra.mxu0 0
    %173 = vmatprep.subr.bf16.mxu0 0
    %174 = vmatpush1.bf16.msra.mxu0 0
    %175 = vmatprep.subr.bf16.mxu0 0
    %176 = vmatpush1.bf16.msra.mxu0 0
    %177 = vmatprep.subr.bf16.mxu0 0
    %178 = vmatpush1.bf16.msra.mxu0 0
    %179 = vmatprep.subr.bf16.mxu0 0
    %180 = vmatpush1.bf16.msra.mxu0 0
    %181 = vmatprep.subr.bf16.mxu0 0
    %182 = vmatpush1.bf16.msra.mxu0 0
    %183 = vmatprep.subr.bf16.mxu0 0
    %184 = vmatpush1.bf16.msra.mxu0 0
    %185 = vmatprep.subr.bf16.mxu0 0
    %186 = vmatpush1.bf16.msra.mxu0 0
    %187 = vmatprep.subr.bf16.mxu0 0
    %188 = vmatpush1.bf16.msra.mxu0 0
    %189 = vmatprep.mubr.bf16.mxu0 0
    %190 = vmatmul.mubr.bf16.gmra.mrb[0].mxu0 %v155
    %v191 = vpop.f32.mrb[0].mxu0
    %v192 = vadd.f32 %v140, %v191
    %v193 = vpop.f32.mrb[0].mxu0
    %v194 = vpop.f32.mrb[0].mxu0
    %v195 = vadd.f32 %v140, %v194
    %v196 = vpop.f32.mrb[0].mxu0
    %197 = vdwg.mxu0
    %v198 = vtanh.pop %v192
    %v199 = vtanh.pop %v195
    %v200 = vpack.c.bf16 %v199, %v198
    %v201 = vld [vmem:[#allocation7] sm:$0xf]
    %v202 = vld [vmem:[#allocation7 + $0x4] sm:$0xf]
    %v203 = vld [vmem:[#allocation7 + $0x8] sm:$0xf]
    %v204 = vld [vmem:[#allocation7 + $0xc] sm:$0xf]
    %v205 = vld [vmem:[#allocation7 + $0x10] sm:$0xf]
    %v206 = vld [vmem:[#allocation7 + $0x14] sm:$0xf]
    %v207 = vld [vmem:[#allocation7 + $0x18] sm:$0xf]
    %v208 = vld [vmem:[#allocation7 + $0x1c] sm:$0xf]
    %v209 = vld [vmem:[#allocation7 + $0x20] sm:$0xf]
    %v210 = vld [vmem:[#allocation7 + $0x24] sm:$0xf]
    %v211 = vld [vmem:[#allocation7 + $0x28] sm:$0xf]
    %v212 = vld [vmem:[#allocation7 + $0x2c] sm:$0xf]
    %v213 = vld [vmem:[#allocation7 + $0x30] sm:$0xf]
    %v214 = vld [vmem:[#allocation7 + $0x34] sm:$0xf]
    %v215 = vld [vmem:[#allocation7 + $0x38] sm:$0xf]
    %v216 = vld [vmem:[#allocation7 + $0x3c] sm:$0xf]
    %v217 = vld [vmem:[%s4] sm:$0x1]
    %v219 = vlaneseq
    %v220 = vshrl.u32 %v219, 7
    %v221 = vsub.s32 0, %v220
    %v222 = vrot.slane %v217, %v221
    %v240 = vunpack.c.l.b16 %v201
    %v241 = vunpack.c.l.b16 %v202
    %v242 = vunpack.c.l.b16 %v203
    %v243 = vunpack.c.l.b16 %v204
    %v244 = vunpack.c.l.b16 %v205
    %v245 = vunpack.c.l.b16 %v206
    %v246 = vunpack.c.l.b16 %v207
    %v247 = vunpack.c.l.b16 %v208
    %v248 = vunpack.c.l.b16 %v209
    %v249 = vunpack.c.l.b16 %v210
    %v250 = vunpack.c.l.b16 %v211
    %v251 = vunpack.c.l.b16 %v212
    %v252 = vunpack.c.l.b16 %v213
    %v253 = vunpack.c.l.b16 %v214
    %v254 = vunpack.c.l.b16 %v215
    %v255 = vunpack.c.l.b16 %v216
    %v256 = vpack.c.b16 %v241, %v240
    %v257 = vpack.c.b16 %v243, %v242
    %v258 = vpack.c.b16 %v245, %v244
    %v259 = vpack.c.b16 %v247, %v246
    %v260 = vpack.c.b16 %v249, %v248
    %v261 = vpack.c.b16 %v251, %v250
    %v262 = vpack.c.b16 %v253, %v252
    %v263 = vpack.c.b16 %v255, %v254
    %272 = vmatprep.subr.bf16.mxu0 0
    %273 = vmatpush1.bf16.msra.mxu0 %v256
    %274 = vmatprep.subr.bf16.mxu0 0
    %275 = vmatpush1.bf16.msra.mxu0 %v257
    %276 = vmatprep.subr.bf16.mxu0 0
    %277 = vmatpush1.bf16.msra.mxu0 %v258
    %278 = vmatprep.subr.bf16.mxu0 0
    %279 = vmatpush1.bf16.msra.mxu0 %v259
    %280 = vmatprep.subr.bf16.mxu0 0
    %281 = vmatpush1.bf16.msra.mxu0 %v260
    %282 = vmatprep.subr.bf16.mxu0 0
    %283 = vmatpush1.bf16.msra.mxu0 %v261
    %284 = vmatprep.subr.bf16.mxu0 0
    %285 = vmatpush1.bf16.msra.mxu0 %v262
    %286 = vmatprep.subr.bf16.mxu0 0
    %287 = vmatpush1.bf16.msra.mxu0 %v263
    %288 = vmatprep.subr.bf16.mxu0 0
    %289 = vmatpush1.bf16.msra.mxu0 0
    %290 = vmatprep.subr.bf16.mxu0 0
    %291 = vmatpush1.bf16.msra.mxu0 0
    %292 = vmatprep.subr.bf16.mxu0 0
    %293 = vmatpush1.bf16.msra.mxu0 0
    %294 = vmatprep.subr.bf16.mxu0 0
    %295 = vmatpush1.bf16.msra.mxu0 0
    %296 = vmatprep.subr.bf16.mxu0 0
    %297 = vmatpush1.bf16.msra.mxu0 0
    %298 = vmatprep.subr.bf16.mxu0 0
    %299 = vmatpush1.bf16.msra.mxu0 0
    %300 = vmatprep.subr.bf16.mxu0 0
    %301 = vmatpush1.bf16.msra.mxu0 0
    %302 = vmatprep.subr.bf16.mxu0 0
    %303 = vmatpush1.bf16.msra.mxu0 0
    %304 = vmatprep.mubr.bf16.mxu0 0
    %305 = vmatmul.mubr.bf16.gmra.mrb[0].mxu0 %v200
    %v306 = vpop.f32.mrb[0].mxu0
    %v307 = vadd.f32 %v222, %v306
    %v308 = vpop.f32.mrb[0].mxu0
    %v309 = vpop.f32.mrb[0].mxu0
    %v310 = vadd.f32 %v222, %v309
    %v311 = vpop.f32.mrb[0].mxu0
    %312 = vdwg.mxu0
    %v313 = vtanh.pop %v307
    %v314 = vtanh.pop %v310
    %v315 = vpack.c.bf16 %v314, %v313
    %v316 = vld [vmem:[#allocation8] sm:$0xf]
    %v317 = vld [vmem:[#allocation8 + $0x4] sm:$0xf]
    %v318 = vld [vmem:[#allocation8 + $0x8] sm:$0xf]
    %v319 = vld [vmem:[#allocation8 + $0xc] sm:$0xf]
    %v320 = vld [vmem:[#allocation8 + $0x10] sm:$0xf]
    %v321 = vld [vmem:[#allocation8 + $0x14] sm:$0xf]
    %v322 = vld [vmem:[#allocation8 + $0x18] sm:$0xf]
    %v323 = vld [vmem:[#allocation8 + $0x1c] sm:$0xf]
    %v324 = vld [vmem:[#allocation8 + $0x20] sm:$0xf]
    %v325 = vld [vmem:[#allocation8 + $0x24] sm:$0xf]
    %v326 = vld [vmem:[#allocation8 + $0x28] sm:$0xf]
    %v327 = vld [vmem:[#allocation8 + $0x2c] sm:$0xf]
    %v328 = vld [vmem:[#allocation8 + $0x30] sm:$0xf]
    %v329 = vld [vmem:[#allocation8 + $0x34] sm:$0xf]
    %v330 = vld [vmem:[#allocation8 + $0x38] sm:$0xf]
    %v331 = vld [vmem:[#allocation8 + $0x3c] sm:$0xf]
    %v332 = vld [vmem:[%s6] sm:$0x1]
    %v334 = vlaneseq
    %v335 = vshrl.u32 %v334, 7
    %v336 = vsub.s32 0, %v335
    %v337 = vrot.slane %v332, %v336
    %v355 = vunpack.c.l.b16 %v316
    %v356 = vunpack.c.l.b16 %v317
    %v357 = vunpack.c.l.b16 %v318
    %v358 = vunpack.c.l.b16 %v319
    %v359 = vunpack.c.l.b16 %v320
    %v360 = vunpack.c.l.b16 %v321
    %v361 = vunpack.c.l.b16 %v322
    %v362 = vunpack.c.l.b16 %v323
    %v363 = vunpack.c.l.b16 %v324
    %v364 = vunpack.c.l.b16 %v325
    %v365 = vunpack.c.l.b16 %v326
    %v366 = vunpack.c.l.b16 %v327
    %v367 = vunpack.c.l.b16 %v328
    %v368 = vunpack.c.l.b16 %v329
    %v369 = vunpack.c.l.b16 %v330
    %v370 = vunpack.c.l.b16 %v331
    %v371 = vpack.c.b16 %v356, %v355
    %v372 = vpack.c.b16 %v358, %v357
    %v373 = vpack.c.b16 %v360, %v359
    %v374 = vpack.c.b16 %v362, %v361
    %v375 = vpack.c.b16 %v364, %v363
    %v376 = vpack.c.b16 %v366, %v365
    %v377 = vpack.c.b16 %v368, %v367
    %v378 = vpack.c.b16 %v370, %v369
    %387 = vmatprep.subr.bf16.mxu0 0
    %388 = vmatpush1.bf16.msra.mxu0 %v371
    %389 = vmatprep.subr.bf16.mxu0 0
    %390 = vmatpush1.bf16.msra.mxu0 %v372
    %391 = vmatprep.subr.bf16.mxu0 0
    %392 = vmatpush1.bf16.msra.mxu0 %v373
    %393 = vmatprep.subr.bf16.mxu0 0
    %394 = vmatpush1.bf16.msra.mxu0 %v374
    %395 = vmatprep.subr.bf16.mxu0 0
    %396 = vmatpush1.bf16.msra.mxu0 %v375
    %397 = vmatprep.subr.bf16.mxu0 0
    %398 = vmatpush1.bf16.msra.mxu0 %v376
    %399 = vmatprep.subr.bf16.mxu0 0
    %400 = vmatpush1.bf16.msra.mxu0 %v377
    %401 = vmatprep.subr.bf16.mxu0 0
    %402 = vmatpush1.bf16.msra.mxu0 %v378
    %403 = vmatprep.subr.bf16.mxu0 0
    %404 = vmatpush1.bf16.msra.mxu0 0
    %405 = vmatprep.subr.bf16.mxu0 0
    %406 = vmatpush1.bf16.msra.mxu0 0
    %407 = vmatprep.subr.bf16.mxu0 0
    %408 = vmatpush1.bf16.msra.mxu0 0
    %409 = vmatprep.subr.bf16.mxu0 0
    %410 = vmatpush1.bf16.msra.mxu0 0
    %411 = vmatprep.subr.bf16.mxu0 0
    %412 = vmatpush1.bf16.msra.mxu0 0
    %413 = vmatprep.subr.bf16.mxu0 0
    %414 = vmatpush1.bf16.msra.mxu0 0
    %415 = vmatprep.subr.bf16.mxu0 0
    %416 = vmatpush1.bf16.msra.mxu0 0
    %417 = vmatprep.subr.bf16.mxu0 0
    %418 = vmatpush1.bf16.msra.mxu0 0
    %419 = vmatprep.mubr.bf16.mxu0 0
    %420 = vmatmul.mubr.bf16.gmra.mrb[0].mxu0 %v315
    %v421 = vpop.f32.mrb[0].mxu0
    %v422 = vadd.f32 %v337, %v421
    %v423 = vpop.f32.mrb[0].mxu0
    %v424 = vpop.f32.mrb[0].mxu0
    %v425 = vadd.f32 %v337, %v424
    %v426 = vpop.f32.mrb[0].mxu0
    %427 = vdwg.mxu0
    %v428 = vlaneseq
    %v429 = vand.u32 %v428, 127
    %vm430 = vcmp.lt.s32.totalorder %v429, 8
    %v431 = vsel %vm430, %v422, -1e+30
    %v432 = vsel %vm430, %v425, -1e+30
    %433 = vmax.xlane.f32.xlu0 %v431
    %v434 = vpop.xlane.xlu0 %433
    %435 = vmax.xlane.f32.xlu0 %v432
    %v436 = vpop.xlane.xlu0 %435
    %v437 = vsub.f32 %v431, %v434
    %v438 = vsub.f32 %v432, %v436
    %v439 = vmul.f32 %v437, 1.442695
    %v440 = vpow.pop %v439
    %v441 = vmul.f32 %v438, 1.442695
    %v442 = vpow.pop %v441
    %443 = vadd.xlane.f32.xlu0 %v440
    %v444 = vpop.xlane.xlu0 %443
    %445 = vadd.xlane.f32.xlu0 %v442
    %v446 = vpop.xlane.xlu0 %445
    %v447 = vrcp.pop %v444
    %v448 = vrcp.pop %v446
    %v449 = vmul.f32 %v440, %v447
    %v450 = vmul.f32 %v442, %v448
    %451 = vst [vmem:[#allocation13] sm:$0xff] %v449
    %452 = vst [vmem:[#allocation13 + $0x8] sm:$0xff] %v450
    %v453 = vld [vmem:[%s7] sm:$0xf]
    %v454 = vld [vmem:[%s7 + $0x4] sm:$0xf]
    %v455 = vld [vmem:[%s8] sm:$0x1]
    %v457 = vlaneseq
    %v458 = vshrl.u32 %v457, 7
    %v459 = vsub.s32 0, %v458
    %v460 = vrot.slane %v455, %v459
    %v464 = vunpack.c.l.b16 %v453
    %v465 = vunpack.c.l.b16 %v454
    %v466 = vpack.c.b16 %v465, %v464
    %468 = vmatprep.subr.bf16.mxu0 0
    %469 = vmatpush1.bf16.msra.mxu0 %v466
    %470 = vmatprep.subr.bf16.mxu0 0
    %471 = vmatpush1.bf16.msra.mxu0 0
    %472 = vmatprep.subr.bf16.mxu0 0
    %473 = vmatpush1.bf16.msra.mxu0 0
    %474 = vmatprep.subr.bf16.mxu0 0
    %475 = vmatpush1.bf16.msra.mxu0 0
    %476 = vmatprep.subr.bf16.mxu0 0
    %477 = vmatpush1.bf16.msra.mxu0 0
    %478 = vmatprep.subr.bf16.mxu0 0
    %479 = vmatpush1.bf16.msra.mxu0 0
    %480 = vmatprep.subr.bf16.mxu0 0
    %481 = vmatpush1.bf16.msra.mxu0 0
    %482 = vmatprep.subr.bf16.mxu0 0
    %483 = vmatpush1.bf16.msra.mxu0 0
    %484 = vmatprep.subr.bf16.mxu0 0
    %485 = vmatpush1.bf16.msra.mxu0 0
    %486 = vmatprep.subr.bf16.mxu0 0
    %487 = vmatpush1.bf16.msra.mxu0 0
    %488 = vmatprep.subr.bf16.mxu0 0
    %489 = vmatpush1.bf16.msra.mxu0 0
    %490 = vmatprep.subr.bf16.mxu0 0
    %491 = vmatpush1.bf16.msra.mxu0 0
    %492 = vmatprep.subr.bf16.mxu0 0
    %493 = vmatpush1.bf16.msra.mxu0 0
    %494 = vmatprep.subr.bf16.mxu0 0
    %495 = vmatpush1.bf16.msra.mxu0 0
    %496 = vmatprep.subr.bf16.mxu0 0
    %497 = vmatpush1.bf16.msra.mxu0 0
    %498 = vmatprep.subr.bf16.mxu0 0
    %499 = vmatpush1.bf16.msra.mxu0 0
    %500 = vmatprep.mubr.bf16.mxu0 0
    %501 = vmatmul.mubr.bf16.gmra.mrb[0].mxu0 %v155
    %v502 = vpop.f32.mrb[0].mxu0
    %v503 = vadd.f32 %v460, %v502
    %v504 = vpop.f32.mrb[0].mxu0
    %v505 = vpop.f32.mrb[0].mxu0
    %v506 = vadd.f32 %v460, %v505
    %v507 = vpop.f32.mrb[0].mxu0
    %508 = vdwg.mxu0
    %v509 = vtanh.pop %v503
    %v510 = vtanh.pop %v506
    %v511 = vpack.c.bf16 %v510, %v509
    %v512 = vld [vmem:[#allocation10] sm:$0xf]
    %v513 = vld [vmem:[#allocation10 + $0x4] sm:$0xf]
    %v514 = vld [vmem:[#allocation10 + $0x8] sm:$0xf]
    %v515 = vld [vmem:[#allocation10 + $0xc] sm:$0xf]
    %v516 = vld [vmem:[#allocation10 + $0x10] sm:$0xf]
    %v517 = vld [vmem:[#allocation10 + $0x14] sm:$0xf]
    %v518 = vld [vmem:[#allocation10 + $0x18] sm:$0xf]
    %v519 = vld [vmem:[#allocation10 + $0x1c] sm:$0xf]
    %v520 = vld [vmem:[#allocation10 + $0x20] sm:$0xf]
    %v521 = vld [vmem:[#allocation10 + $0x24] sm:$0xf]
    %v522 = vld [vmem:[#allocation10 + $0x28] sm:$0xf]
    %v523 = vld [vmem:[#allocation10 + $0x2c] sm:$0xf]
    %v524 = vld [vmem:[#allocation10 + $0x30] sm:$0xf]
    %v525 = vld [vmem:[#allocation10 + $0x34] sm:$0xf]
    %v526 = vld [vmem:[#allocation10 + $0x38] sm:$0xf]
    %v527 = vld [vmem:[#allocation10 + $0x3c] sm:$0xf]
    %v528 = vld [vmem:[%s10] sm:$0x1]
    %v530 = vlaneseq
    %v531 = vshrl.u32 %v530, 7
    %v532 = vsub.s32 0, %v531
    %v533 = vrot.slane %v528, %v532
    %v551 = vunpack.c.l.b16 %v512
    %v552 = vunpack.c.l.b16 %v513
    %v553 = vunpack.c.l.b16 %v514
    %v554 = vunpack.c.l.b16 %v515
    %v555 = vunpack.c.l.b16 %v516
    %v556 = vunpack.c.l.b16 %v517
    %v557 = vunpack.c.l.b16 %v518
    %v558 = vunpack.c.l.b16 %v519
    %v559 = vunpack.c.l.b16 %v520
    %v560 = vunpack.c.l.b16 %v521
    %v561 = vunpack.c.l.b16 %v522
    %v562 = vunpack.c.l.b16 %v523
    %v563 = vunpack.c.l.b16 %v524
    %v564 = vunpack.c.l.b16 %v525
    %v565 = vunpack.c.l.b16 %v526
    %v566 = vunpack.c.l.b16 %v527
    %v567 = vpack.c.b16 %v552, %v551
    %v568 = vpack.c.b16 %v554, %v553
    %v569 = vpack.c.b16 %v556, %v555
    %v570 = vpack.c.b16 %v558, %v557
    %v571 = vpack.c.b16 %v560, %v559
    %v572 = vpack.c.b16 %v562, %v561
    %v573 = vpack.c.b16 %v564, %v563
    %v574 = vpack.c.b16 %v566, %v565
    %583 = vmatprep.subr.bf16.mxu0 0
    %584 = vmatpush1.bf16.msra.mxu0 %v567
    %585 = vmatprep.subr.bf16.mxu0 0
    %586 = vmatpush1.bf16.msra.mxu0 %v568
    %587 = vmatprep.subr.bf16.mxu0 0
    %588 = vmatpush1.bf16.msra.mxu0 %v569
    %589 = vmatprep.subr.bf16.mxu0 0
    %590 = vmatpush1.bf16.msra.mxu0 %v570
    %591 = vmatprep.subr.bf16.mxu0 0
    %592 = vmatpush1.bf16.msra.mxu0 %v571
    %593 = vmatprep.subr.bf16.mxu0 0
    %594 = vmatpush1.bf16.msra.mxu0 %v572
    %595 = vmatprep.subr.bf16.mxu0 0
    %596 = vmatpush1.bf16.msra.mxu0 %v573
    %597 = vmatprep.subr.bf16.mxu0 0
    %598 = vmatpush1.bf16.msra.mxu0 %v574
    %599 = vmatprep.subr.bf16.mxu0 0
    %600 = vmatpush1.bf16.msra.mxu0 0
    %601 = vmatprep.subr.bf16.mxu0 0
    %602 = vmatpush1.bf16.msra.mxu0 0
    %603 = vmatprep.subr.bf16.mxu0 0
    %604 = vmatpush1.bf16.msra.mxu0 0
    %605 = vmatprep.subr.bf16.mxu0 0
    %606 = vmatpush1.bf16.msra.mxu0 0
    %607 = vmatprep.subr.bf16.mxu0 0
    %608 = vmatpush1.bf16.msra.mxu0 0
    %609 = vmatprep.subr.bf16.mxu0 0
    %610 = vmatpush1.bf16.msra.mxu0 0
    %611 = vmatprep.subr.bf16.mxu0 0
    %612 = vmatpush1.bf16.msra.mxu0 0
    %613 = vmatprep.subr.bf16.mxu0 0
    %614 = vmatpush1.bf16.msra.mxu0 0
    %615 = vmatprep.mubr.bf16.mxu0 0
    %616 = vmatmul.mubr.bf16.gmra.mrb[0].mxu0 %v511
    %v617 = vpop.f32.mrb[0].mxu0
    %v618 = vadd.f32 %v533, %v617
    %v619 = vpop.f32.mrb[0].mxu0
    %v620 = vpop.f32.mrb[0].mxu0
    %v621 = vadd.f32 %v533, %v620
    %v622 = vpop.f32.mrb[0].mxu0
    %623 = vdwg.mxu0
    %v624 = vtanh.pop %v618
    %v625 = vtanh.pop %v621
    %v626 = vpack.c.bf16 %v625, %v624
    %v627 = vld [vmem:[#allocation11] sm:$0xf]
    %v628 = vld [vmem:[#allocation11 + $0x4] sm:$0xf]
    %v629 = vld [vmem:[#allocation11 + $0x8] sm:$0xf]
    %v630 = vld [vmem:[#allocation11 + $0xc] sm:$0xf]
    %v631 = vld [vmem:[#allocation11 + $0x10] sm:$0xf]
    %v632 = vld [vmem:[#allocation11 + $0x14] sm:$0xf]
    %v633 = vld [vmem:[#allocation11 + $0x18] sm:$0xf]
    %v634 = vld [vmem:[#allocation11 + $0x1c] sm:$0xf]
    %v635 = vld [vmem:[#allocation11 + $0x20] sm:$0xf]
    %v636 = vld [vmem:[#allocation11 + $0x24] sm:$0xf]
    %v637 = vld [vmem:[#allocation11 + $0x28] sm:$0xf]
    %v638 = vld [vmem:[#allocation11 + $0x2c] sm:$0xf]
    %v639 = vld [vmem:[#allocation11 + $0x30] sm:$0xf]
    %v640 = vld [vmem:[#allocation11 + $0x34] sm:$0xf]
    %v641 = vld [vmem:[#allocation11 + $0x38] sm:$0xf]
    %v642 = vld [vmem:[#allocation11 + $0x3c] sm:$0xf]
    %v643 = vld [vmem:[%s12] sm:$0x1]
    %v645 = vlaneseq
    %v646 = vshrl.u32 %v645, 7
    %v647 = vsub.s32 0, %v646
    %v648 = vrot.slane %v643, %v647
    %v666 = vunpack.c.l.b16 %v627
    %v667 = vunpack.c.l.b16 %v628
    %v668 = vunpack.c.l.b16 %v629
    %v669 = vunpack.c.l.b16 %v630
    %v670 = vunpack.c.l.b16 %v631
    %v671 = vunpack.c.l.b16 %v632
    %v672 = vunpack.c.l.b16 %v633
    %v673 = vunpack.c.l.b16 %v634
    %v674 = vunpack.c.l.b16 %v635
    %v675 = vunpack.c.l.b16 %v636
    %v676 = vunpack.c.l.b16 %v637
    %v677 = vunpack.c.l.b16 %v638
    %v678 = vunpack.c.l.b16 %v639
    %v679 = vunpack.c.l.b16 %v640
    %v680 = vunpack.c.l.b16 %v641
    %v681 = vunpack.c.l.b16 %v642
    %v682 = vpack.c.b16 %v667, %v666
    %v683 = vpack.c.b16 %v669, %v668
    %v684 = vpack.c.b16 %v671, %v670
    %v685 = vpack.c.b16 %v673, %v672
    %v686 = vpack.c.b16 %v675, %v674
    %v687 = vpack.c.b16 %v677, %v676
    %v688 = vpack.c.b16 %v679, %v678
    %v689 = vpack.c.b16 %v681, %v680
    %698 = vmatprep.subr.bf16.mxu0 0
    %699 = vmatpush1.bf16.msra.mxu0 %v682
    %700 = vmatprep.subr.bf16.mxu0 0
    %701 = vmatpush1.bf16.msra.mxu0 %v683
    %702 = vmatprep.subr.bf16.mxu0 0
    %703 = vmatpush1.bf16.msra.mxu0 %v684
    %704 = vmatprep.subr.bf16.mxu0 0
    %705 = vmatpush1.bf16.msra.mxu0 %v685
    %706 = vmatprep.subr.bf16.mxu0 0
    %707 = vmatpush1.bf16.msra.mxu0 %v686
    %708 = vmatprep.subr.bf16.mxu0 0
    %709 = vmatpush1.bf16.msra.mxu0 %v687
    %710 = vmatprep.subr.bf16.mxu0 0
    %711 = vmatpush1.bf16.msra.mxu0 %v688
    %712 = vmatprep.subr.bf16.mxu0 0
    %713 = vmatpush1.bf16.msra.mxu0 %v689
    %714 = vmatprep.subr.bf16.mxu0 0
    %715 = vmatpush1.bf16.msra.mxu0 0
    %716 = vmatprep.subr.bf16.mxu0 0
    %717 = vmatpush1.bf16.msra.mxu0 0
    %718 = vmatprep.subr.bf16.mxu0 0
    %719 = vmatpush1.bf16.msra.mxu0 0
    %720 = vmatprep.subr.bf16.mxu0 0
    %721 = vmatpush1.bf16.msra.mxu0 0
    %722 = vmatprep.subr.bf16.mxu0 0
    %723 = vmatpush1.bf16.msra.mxu0 0
    %724 = vmatprep.subr.bf16.mxu0 0
    %725 = vmatpush1.bf16.msra.mxu0 0
    %726 = vmatprep.subr.bf16.mxu0 0
    %727 = vmatpush1.bf16.msra.mxu0 0
    %728 = vmatprep.subr.bf16.mxu0 0
    %729 = vmatpush1.bf16.msra.mxu0 0
    %730 = vmatprep.mubr.bf16.mxu0 0
    %731 = vmatmul.mubr.bf16.gmra.mrb[0].mxu0 %v626
    %v732 = vpop.f32.mrb[0].mxu0
    %v733 = vadd.f32 %v648, %v732
    %v734 = vpop.f32.mrb[0].mxu0
    %v735 = vpop.f32.mrb[0].mxu0
    %v736 = vadd.f32 %v648, %v735
    %v737 = vpop.f32.mrb[0].mxu0
    %738 = vdwg.mxu0
    %739 = vst [vmem:[#allocation14] sm:$0xff] %v733
    %740 = vst [vmem:[#allocation14 + $0x8] sm:$0xff] %v736
    // Predicated region
    $region78: #{tpu_custom_call.1} parent=1 // pred_check
      _
    $region79: #{tpu_custom_call.1} parent=1 // pred_check_branch
      %742 = sbr.rel (0) target = $region81
    $region80: #{tpu_custom_call.1} parent=1 // pred_region
      %s744 = ssub.s32 256, 256
      %745 = vsyncadd [#allocation4], %s744
      %s746 = sshll.u32 [#allocation13], 4
      %s747 = int_to_ptr.vmem [resolvable:$true] %s746
      %752 = dma.vmem_to_hbm [thread:$0]  %s747, 256, %s13, [#allocation4], 128, 128, 8
    $region81: #{tpu_custom_call.1} parent=1 // pred_fallthru
      _
    // Predicated region
    $region82: #{tpu_custom_call.1} parent=1 // pred_check
      _
    $region83: #{tpu_custom_call.1} parent=1 // pred_check_branch
      %754 = sbr.rel (0) target = $region85
    $region84: #{tpu_custom_call.1} parent=1 // pred_region
      %s756 = ssub.s32 256, 256
      %757 = vsyncadd [#allocation15], %s756
      %s758 = sshll.u32 [#allocation14], 4
      %s759 = int_to_ptr.vmem [resolvable:$true] %s758
      %764 = dma.vmem_to_hbm [thread:$0]  %s759, 256, %s14, [#allocation15], 128, 128, 8
    $region85: #{tpu_custom_call.1} parent=1 // pred_fallthru
      _
    // Predicated region
    $region86: #{tpu_custom_call.1} parent=1 // pred_check
      _
    $region87: #{tpu_custom_call.1} parent=1 // pred_check_branch
      %766 = sbr.rel (0) target = $region89
    $region88: #{tpu_custom_call.1} parent=1 // pred_region
      %767 = dma.done [#allocation4], 256
    $region89: #{tpu_custom_call.1} parent=1 // pred_fallthru
      _
    // Predicated region
    $region90: #{tpu_custom_call.1} parent=1 // pred_check
      _
    $region91: #{tpu_custom_call.1} parent=1 // pred_check_branch
      %769 = sbr.rel (0) target = $region93
    $region92: #{tpu_custom_call.1} parent=1 // pred_region
      %770 = dma.done [#allocation15], 256
    $region93: #{tpu_custom_call.1} parent=1 // pred_fallthru
      _
    %771 = vsyncpa [#allocation3], 1
    %772 = vsyncpa [#allocation6], 1
    %773 = vsyncpa [#allocation9], 1
    %774 = vsyncpa [#allocation12], 1
    %775 = vsyncpa [#allocation4], 1
    %776 = vsyncpa [#allocation15], 1

</llo_original>
